<compile_context>
chip_gen: v7x
topology: tpu7x:2x2x1
jax: 0.10.0
libtpu: 0.0.40
codegen_flags: <defaults>
</compile_context>

<pallas_src>
import functools

import jax
import jax.numpy as jnp
from jax import lax
from jax.experimental import pallas as pl
from jax.experimental.pallas import tpu as pltpu


def _round_up(n, m):
    return ((n + m - 1) // m) * m


def _cdiv(a, b):
    return -(-a // b)


def _choose_tm(batch):
    """Adaptive batch tile: multiple of 16, bounded padding waste, and >=2
    tiles for mid/large batches so v7x's two TensorCores both get work."""
    if batch <= 256:
        return _round_up(batch, 16)
    if batch <= 4096:
        # Split into two tiles (megacore-friendly); padding < 16 rows/tile.
        return _round_up(_cdiv(batch, 2), 16)
    for tm in (2048, 1024, 512, 256):
        if (_round_up(batch, tm) - batch) / batch <= 0.0625:
            return tm
    return 256


def dueling_dqn_kernel(x_ref,        # [TM, obs]  f32  (cast to bf16 in-kernel)
                       w1_ref,       # [obs, 128] bf16
                       w2_ref,       # [128, 64]  bf16
                       w34_ref,      # [64, 256]  bf16  (fc3 fused with head stage 1)
                       wh2_ref,      # [256, 128] bf16  (cols 0..A-1: adv_j+value, col A: sum_j adv_j)
                       bias_ref,     # [4, 256]   f32   (packed biases)
                       out_ref,      # [TM, 128]  bf16
                       psum_ref,     # [1, 8, 128] f32  (masked per-tile sum of col A at [0,0,0])
                       *, action_space, batch, block_m):
    A = action_space

    # Unpack the bias slab (static slices, zero runtime cost).
    b1 = bias_ref[0:1, 0:128]
    b2 = bias_ref[1:2, 0:64]
    b34 = bias_ref[2:3, 0:256]
    bh2 = bias_ref[3:4, 0:128]

    x = x_ref[...].astype(jnp.bfloat16)

    # Trunk: obs -> 128 -> 64  (bf16 operands, f32 accumulate)
    h1 = jnp.dot(x, w1_ref[...], preferred_element_type=jnp.float32) + b1
    h1 = jnp.maximum(h1, 0.0).astype(jnp.bfloat16)

    h2 = jnp.dot(h1, w2_ref[...], preferred_element_type=jnp.float32) + b2
    h2 = jnp.maximum(h2, 0.0).astype(jnp.bfloat16)

    # Fused fc3 + head stage 1: 64 -> 256  ([value_hidden | adv_hidden])
    heads = jnp.dot(h2, w34_ref[...], preferred_element_type=jnp.float32) + b34
    heads = jnp.maximum(heads, 0.0).astype(jnp.bfloat16)

    # Head stage 2 (block-diag, value folded in): 256 -> 128 lane-padded.
    #   cols 0..A-1 = value + advantage_j, col A = sum_j advantage_j.
    out2 = jnp.dot(heads, wh2_ref[...], preferred_element_type=jnp.float32) + bh2

    # Per-tile partial sum of row-wise advantage sums, masking padded rows.
    row = lax.broadcasted_iota(jnp.int32, (block_m, 128), 0) + pl.program_id(0) * block_m
    col = lax.broadcasted_iota(jnp.int32, (block_m, 128), 1)
    sel = (col == A) & (row < batch)
    psum = jnp.sum(jnp.where(sel, out2, 0.0))

    r8 = lax.broadcasted_iota(jnp.int32, (8, 128), 0)
    c8 = lax.broadcasted_iota(jnp.int32, (8, 128), 1)
    psum_ref[0] = jnp.where((r8 == 0) & (c8 == 0), psum, 0.0)

    # Lane-dense bf16 store (f32 accumulation preserved above).
    out_ref[...] = out2.astype(jnp.bfloat16)


def dueling_dqn_forward(x, packed, action_space):
    """x: [B, obs] float32.  packed: dict from pack_params()."""
    B, obs = x.shape
    A = action_space

    w1, w2, w34, wh2, bias = (packed[k] for k in ("w1", "w2", "w34", "wh2", "bias"))

    TM = _choose_tm(B)
    B_pad = _round_up(B, TM)
    if B_pad != B:
        x = jnp.pad(x, ((0, B_pad - B), (0, 0)))
    num_tiles = B_pad // TM

    raw, psums = pl.pallas_call(
        functools.partial(dueling_dqn_kernel, action_space=A, batch=B, block_m=TM),
        out_shape=(
            jax.ShapeDtypeStruct((B_pad, 128), jnp.bfloat16),
            jax.ShapeDtypeStruct((num_tiles, 8, 128), jnp.float32),
        ),
        grid=(num_tiles,),
        in_specs=[
            pl.BlockSpec((TM, obs), lambda i: (i, 0)),     # x: batch-tiled
            pl.BlockSpec(w1.shape, lambda i: (0, 0)),      # weights: VMEM-resident
            pl.BlockSpec(w2.shape, lambda i: (0, 0)),
            pl.BlockSpec(w34.shape, lambda i: (0, 0)),
            pl.BlockSpec(wh2.shape, lambda i: (0, 0)),
            pl.BlockSpec(bias.shape, lambda i: (0, 0)),
        ],
        out_specs=(
            pl.BlockSpec((TM, 128), lambda i: (i, 0)),
            pl.BlockSpec((1, 8, 128), lambda i: (i, 0, 0)),
        ),
        compiler_params=pltpu.CompilerParams(
            dimension_semantics=("parallel",),
            vmem_limit_bytes=32 * 1024 * 1024,
        ),
    )(x, w1, w2, w34, wh2, bias)

    # Global adv.mean() couples all batch tiles -> finished here from the
    # per-tile masked partial sums (single scalar combine, XLA-fused).
    mean = jnp.sum(psums) / (B * A)
    return raw[:B, :A].astype(jnp.float32) - mean


def init_params(key, observation_space, action_space):
    """Torch-like nn.Linear init (uniform +-1/sqrt(fan_in)).
    Weights stored pre-transposed as [in, out]; biases as [1, out]."""
    def linear(key, fan_in, fan_out):
        kw, kb = jax.random.split(key)
        bound = 1.0 / (fan_in ** 0.5)
        w = jax.random.uniform(kw, (fan_in, fan_out), jnp.float32, -bound, bound)
        b = jax.random.uniform(kb, (1, fan_out), jnp.float32, -bound, bound)
        return w, b

    keys = jax.random.split(key, 7)
    p = {}
    p["w1"], p["b1"] = linear(keys[0], observation_space, 128)
    p["w2"], p["b2"] = linear(keys[1], 128, 64)
    p["w3"], p["b3"] = linear(keys[2], 64, action_space)
    p["wa1"], p["ba1"] = linear(keys[3], action_space, 128)
    p["wa2"], p["ba2"] = linear(keys[4], 128, action_space)
    p["wv1"], p["bv1"] = linear(keys[5], action_space, 128)
    p["wv2"], p["bv2"] = linear(keys[6], 128, 1)
    return p


def pack_params(p, action_space):
    """Offline packing: fc3/head fusion, value-fold + adv-sum column, bf16
    weights, single f32 bias slab."""
    A = action_space
    bf = jnp.bfloat16

    w1 = p["w1"].astype(bf)
    w2 = p["w2"].astype(bf)

    # Fuse fc3 with the first linear of both heads (exact: no nonlinearity
    # between them).  Product computed in f32, then cast.
    wh1 = jnp.concatenate([p["wv1"], p["wa1"]], axis=1)          # [A, 256]
    bh1 = jnp.concatenate([p["bv1"], p["ba1"]], axis=1)          # [1, 256]
    w34 = (p["w3"] @ wh1).astype(bf)                             # [64, 256]
    b34 = p["b3"] @ wh1 + bh1                                    # [1, 256] f32

    # Stage-2 head weight, lane-padded to 128 output cols:
    #   cols 0..A-1: advantage_j + value (wv2 broadcast/folded in)
    #   col  A     : row-wise sum of advantage (drives the global mean)
    wh2 = jnp.zeros((256, 128), jnp.float32)
    wh2 = wh2.at[0:128, 0:A].set(jnp.broadcast_to(p["wv2"], (128, A)))
    wh2 = wh2.at[128:256, 0:A].set(p["wa2"])
    wh2 = wh2.at[128:256, A].set(jnp.sum(p["wa2"], axis=1))
    wh2 = wh2.astype(bf)

    bh2 = jnp.zeros((128,), jnp.float32)
    bh2 = bh2.at[0:A].set(p["ba2"][0] + p["bv2"][0, 0])
    bh2 = bh2.at[A].set(jnp.sum(p["ba2"][0]))

    # Single f32 bias slab [4, 256] (one small DMA).
    bias = jnp.zeros((4, 256), jnp.float32)
    bias = bias.at[0, 0:128].set(p["b1"][0])
    bias = bias.at[1, 0:64].set(p["b2"][0])
    bias = bias.at[2, 0:256].set(b34[0])
    bias = bias.at[3, 0:128].set(bh2)

    return {"w1": w1, "w2": w2, "w34": w34, "wh2": wh2, "bias": bias}


def reference_forward(x, packed, action_space):
    """Pure-JAX reference mirroring the packed (bf16) kernel math."""
    A = action_space
    B = x.shape[0]
    w1, w2, w34, wh2, bias = (packed[k] for k in ("w1", "w2", "w34", "wh2", "bias"))

    b1 = bias[0:1, 0:128]
    b2 = bias[1:2, 0:64]
    b34 = bias[2:3, 0:256]
    bh2 = bias[3:4, 0:128]

    xb = x.astype(jnp.bfloat16)
    h1 = jnp.maximum(jnp.dot(xb, w1, preferred_element_type=jnp.float32) + b1, 0.0)
    h2 = jnp.maximum(jnp.dot(h1.astype(jnp.bfloat16), w2,
                             preferred_element_type=jnp.float32) + b2, 0.0)
    heads = jnp.maximum(jnp.dot(h2.astype(jnp.bfloat16), w34,
                                preferred_element_type=jnp.float32) + b34, 0.0)
    out2 = jnp.dot(heads.astype(jnp.bfloat16), wh2,
                   preferred_element_type=jnp.float32) + bh2
    mean = jnp.sum(out2[:, A]) / (B * A)
    return out2[:, :A].astype(jnp.bfloat16).astype(jnp.float32) - mean


def reference_forward_f32(x, p, action_space):
    """Torch-faithful f32 reference with the original (unpacked) params."""
    h1 = jnp.maximum(x @ p["w1"] + p["b1"], 0.0)
    h2 = jnp.maximum(h1 @ p["w2"] + p["b2"], 0.0)
    action = h2 @ p["w3"] + p["b3"]
    value = jnp.maximum(action @ p["wv1"] + p["bv1"], 0.0) @ p["wv2"] + p["bv2"]
    adv = jnp.maximum(action @ p["wa1"] + p["ba1"], 0.0) @ p["wa2"] + p["ba2"]
    return value + adv - jnp.mean(adv)


if __name__ == "__main__":
    observation_space = 16
    action_space = 7
    batch = 2

    key = jax.random.PRNGKey(0)
    k_x, k_p = jax.random.split(key)

    x = jax.random.normal(k_x, (batch, observation_space), jnp.float32)
    params = init_params(k_p, observation_space, action_space)
    packed = pack_params(params, action_space)

    out = dueling_dqn_forward(x, packed, action_space)
    out = jax.block_until_ready(out)

    assert out.shape == (batch, action_space)

    ref = reference_forward(x, packed, action_space)
    assert jnp.allclose(out, ref, atol=2e-2, rtol=2e-2), "mismatch vs packed reference"

    ref32 = reference_forward_f32(x, params, action_space)
    assert jnp.allclose(out, ref32, atol=5e-2, rtol=5e-2), "mismatch vs f32 reference"

    print("KERNEL_OK")
</pallas_src>

<mosaic_0001>
module attributes {stable_mosaic.version = 11 : i64} {
  func.func @dueling_dqn_kernel(%arg0: i32, %arg1: memref<16x16xf32, #tpu.memory_space<vmem>>, %arg2: memref<16x128xbf16, #tpu.memory_space<vmem>>, %arg3: memref<128x64xbf16, #tpu.memory_space<vmem>>, %arg4: memref<64x256xbf16, #tpu.memory_space<vmem>>, %arg5: memref<256x128xbf16, #tpu.memory_space<vmem>>, %arg6: memref<4x256xf32, #tpu.memory_space<vmem>>, %arg7: memref<16x128xbf16, #tpu.memory_space<vmem>>, %arg8: memref<1x8x128xf32, #tpu.memory_space<vmem>>) attributes {dimension_semantics = [#tpu.dimension_semantics<parallel>], iteration_bounds = array<i64: 1>, scalar_prefetch = 0 : i64, scratch_operands = 0 : i64, tpu.core_type = #tpu.core_type<tc>, window_params = [{transform_indices = @transform_0, window_bounds = array<i64: 16, 16>}, {pipeline_mode = #tpu.pipeline_mode<synchronous>, transform_indices = @transform_1, window_bounds = array<i64: 16, 128>}, {pipeline_mode = #tpu.pipeline_mode<synchronous>, transform_indices = @transform_2, window_bounds = array<i64: 128, 64>}, {pipeline_mode = #tpu.pipeline_mode<synchronous>, transform_indices = @transform_3, window_bounds = array<i64: 64, 256>}, {pipeline_mode = #tpu.pipeline_mode<synchronous>, transform_indices = @transform_4, window_bounds = array<i64: 256, 128>}, {pipeline_mode = #tpu.pipeline_mode<synchronous>, transform_indices = @transform_5, window_bounds = array<i64: 4, 256>}, {transform_indices = @transform_6, window_bounds = array<i64: 16, 128>}, {transform_indices = @transform_7, window_bounds = array<i64: 1, 8, 128>}]} {
    %c0 = arith.constant 0 : index
    %c0_0 = arith.constant 0 : index
    %0 = vector.load %arg6[%c0, %c0_0] : memref<4x256xf32, #tpu.memory_space<vmem>>, vector<1x128xf32>
    %c1 = arith.constant 1 : index
    %c0_1 = arith.constant 0 : index
    %1 = vector.load %arg6[%c1, %c0_1] : memref<4x256xf32, #tpu.memory_space<vmem>>, vector<1x64xf32>
    %c2 = arith.constant 2 : index
    %c0_2 = arith.constant 0 : index
    %2 = vector.load %arg6[%c2, %c0_2] : memref<4x256xf32, #tpu.memory_space<vmem>>, vector<1x256xf32>
    %c3 = arith.constant 3 : index
    %c0_3 = arith.constant 0 : index
    %3 = vector.load %arg6[%c3, %c0_3] : memref<4x256xf32, #tpu.memory_space<vmem>>, vector<1x128xf32>
    %c0_4 = arith.constant 0 : index
    %c0_5 = arith.constant 0 : index
    %4 = vector.load %arg1[%c0_4, %c0_5] : memref<16x16xf32, #tpu.memory_space<vmem>>, vector<16x16xf32>
    %5 = arith.truncf %4 : vector<16x16xf32> to vector<16x16xbf16>
    %c0_6 = arith.constant 0 : index
    %c0_7 = arith.constant 0 : index
    %6 = vector.load %arg2[%c0_6, %c0_7] : memref<16x128xbf16, #tpu.memory_space<vmem>>, vector<16x128xbf16>
    %cst = arith.constant dense<0.000000e+00> : vector<16x128xf32>
    %7 = tpu.matmul %5, %6, %cst {dimension_numbers = #tpu.dot_dimension_numbers<[1], [0], [0], [1], [0, 0, 1, 1], [], []>} : vector<16x16xbf16>, vector<16x128xbf16>, vector<16x128xf32> -> vector<16x128xf32>
    %8 = vector.broadcast %0 : vector<1x128xf32> to vector<16x128xf32>
    %9 = arith.addf %7, %8 : vector<16x128xf32>
    %cst_8 = arith.constant 0.000000e+00 : f32
    %10 = vector.broadcast %cst_8 : f32 to vector<16x128xf32>
    %11 = arith.maximumf %9, %10 : vector<16x128xf32>
    %12 = arith.truncf %11 : vector<16x128xf32> to vector<16x128xbf16>
    %c0_9 = arith.constant 0 : index
    %c0_10 = arith.constant 0 : index
    %13 = vector.load %arg3[%c0_9, %c0_10] : memref<128x64xbf16, #tpu.memory_space<vmem>>, vector<128x64xbf16>
    %cst_11 = arith.constant dense<0.000000e+00> : vector<16x64xf32>
    %14 = tpu.matmul %12, %13, %cst_11 {dimension_numbers = #tpu.dot_dimension_numbers<[1], [0], [0], [1], [0, 0, 1, 1], [], []>} : vector<16x128xbf16>, vector<128x64xbf16>, vector<16x64xf32> -> vector<16x64xf32>
    %15 = vector.broadcast %1 : vector<1x64xf32> to vector<16x64xf32>
    %16 = arith.addf %14, %15 : vector<16x64xf32>
    %cst_12 = arith.constant 0.000000e+00 : f32
    %17 = vector.broadcast %cst_12 : f32 to vector<16x64xf32>
    %18 = arith.maximumf %16, %17 : vector<16x64xf32>
    %19 = arith.truncf %18 : vector<16x64xf32> to vector<16x64xbf16>
    %c0_13 = arith.constant 0 : index
    %c0_14 = arith.constant 0 : index
    %20 = vector.load %arg4[%c0_13, %c0_14] : memref<64x256xbf16, #tpu.memory_space<vmem>>, vector<64x256xbf16>
    %cst_15 = arith.constant dense<0.000000e+00> : vector<16x256xf32>
    %21 = tpu.matmul %19, %20, %cst_15 {dimension_numbers = #tpu.dot_dimension_numbers<[1], [0], [0], [1], [0, 0, 1, 1], [], []>} : vector<16x64xbf16>, vector<64x256xbf16>, vector<16x256xf32> -> vector<16x256xf32>
    %22 = vector.broadcast %2 : vector<1x256xf32> to vector<16x256xf32>
    %23 = arith.addf %21, %22 : vector<16x256xf32>
    %cst_16 = arith.constant 0.000000e+00 : f32
    %24 = vector.broadcast %cst_16 : f32 to vector<16x256xf32>
    %25 = arith.maximumf %23, %24 : vector<16x256xf32>
    %26 = arith.truncf %25 : vector<16x256xf32> to vector<16x256xbf16>
    %c0_17 = arith.constant 0 : index
    %c0_18 = arith.constant 0 : index
    %27 = vector.load %arg5[%c0_17, %c0_18] : memref<256x128xbf16, #tpu.memory_space<vmem>>, vector<256x128xbf16>
    %cst_19 = arith.constant dense<0.000000e+00> : vector<16x128xf32>
    %28 = tpu.matmul %26, %27, %cst_19 {dimension_numbers = #tpu.dot_dimension_numbers<[1], [0], [0], [1], [0, 0, 1, 1], [], []>} : vector<16x256xbf16>, vector<256x128xbf16>, vector<16x128xf32> -> vector<16x128xf32>
    %29 = vector.broadcast %3 : vector<1x128xf32> to vector<16x128xf32>
    %30 = arith.addf %28, %29 : vector<16x128xf32>
    %31 = tpu.iota {dimensions = array<i32: 0>} : vector<16x128xi32>
    %c16_i32 = arith.constant 16 : i32
    %32 = arith.muli %arg0, %c16_i32 : i32
    %33 = vector.broadcast %32 : i32 to vector<16x128xi32>
    %34 = arith.addi %31, %33 : vector<16x128xi32>
    %35 = tpu.iota {dimensions = array<i32: 1>} : vector<16x128xi32>
    %c7_i32 = arith.constant 7 : i32
    %36 = vector.broadcast %c7_i32 : i32 to vector<16x128xi32>
    %37 = arith.cmpi eq, %35, %36 : vector<16x128xi32>
    %c2_i32 = arith.constant 2 : i32
    %38 = vector.broadcast %c2_i32 : i32 to vector<16x128xi32>
    %39 = arith.cmpi slt, %34, %38 : vector<16x128xi32>
    %40 = arith.andi %37, %39 : vector<16x128xi1>
    %cst_20 = arith.constant 0.000000e+00 : f32
    %41 = vector.broadcast %cst_20 : f32 to vector<16x128xf32>
    %42 = arith.select %40, %30, %41 : vector<16x128xi1>, vector<16x128xf32>
    %43 = vector.shape_cast %42 : vector<16x128xf32> to vector<1x16x128xf32>
    %cst_21 = arith.constant dense<0.000000e+00> : vector<1xf32>
    %44 = vector.multi_reduction <add>, %43, %cst_21 [1, 2] : vector<1x16x128xf32> to vector<1xf32>
    %45 = vector.shape_cast %44 : vector<1xf32> to vector<1x1x1xf32>
    %46 = vector.extract %45[0, 0, 0] : f32 from vector<1x1x1xf32>
    %47 = tpu.iota {dimensions = array<i32: 0>} : vector<8x128xi32>
    %48 = tpu.iota {dimensions = array<i32: 1>} : vector<8x128xi32>
    %c0_i32 = arith.constant 0 : i32
    %49 = vector.broadcast %c0_i32 : i32 to vector<8x128xi32>
    %50 = arith.cmpi eq, %47, %49 : vector<8x128xi32>
    %c0_i32_22 = arith.constant 0 : i32
    %51 = vector.broadcast %c0_i32_22 : i32 to vector<8x128xi32>
    %52 = arith.cmpi eq, %48, %51 : vector<8x128xi32>
    %53 = arith.andi %50, %52 : vector<8x128xi1>
    %cst_23 = arith.constant 0.000000e+00 : f32
    %54 = vector.broadcast %46 : f32 to vector<8x128xf32>
    %55 = vector.broadcast %cst_23 : f32 to vector<8x128xf32>
    %56 = arith.select %53, %54, %55 : vector<8x128xi1>, vector<8x128xf32>
    %c0_24 = arith.constant 0 : index
    %c0_25 = arith.constant 0 : index
    %c0_26 = arith.constant 0 : index
    %57 = vector.load %arg8[%c0_24, %c0_25, %c0_26] : memref<1x8x128xf32, #tpu.memory_space<vmem>>, vector<1x8x128xf32>
    %58 = vector.shape_cast %57 : vector<1x8x128xf32> to vector<8x128xf32>
    %59 = vector.shape_cast %56 : vector<8x128xf32> to vector<1x8x128xf32>
    tpu.vector_store %arg8[%c0_24, %c0_25, %c0_26], %59 {strides = array<i32>} : memref<1x8x128xf32, #tpu.memory_space<vmem>>, vector<1x8x128xf32>,
    %60 = arith.truncf %30 : vector<16x128xf32> to vector<16x128xbf16>
    %c0_27 = arith.constant 0 : index
    %c0_28 = arith.constant 0 : index
    %61 = vector.load %arg7[%c0_27, %c0_28] : memref<16x128xbf16, #tpu.memory_space<vmem>>, vector<16x128xbf16>
    tpu.vector_store %arg7[%c0_27, %c0_28], %60 {strides = array<i32>} : memref<16x128xbf16, #tpu.memory_space<vmem>>, vector<16x128xbf16>,
    return
  }
  func.func @transform_0(%arg0: i32) -> (i32, i32) {
    %c0_i32 = arith.constant 0 : i32
    %c0_i32_0 = arith.constant 0 : i32
    return %arg0, %c0_i32 : i32, i32
  }
  func.func @transform_1(%arg0: i32) -> (i32, i32) {
    %c0_i32 = arith.constant 0 : i32
    %c0_i32_0 = arith.constant 0 : i32
    %c0_i32_1 = arith.constant 0 : i32
    return %c0_i32, %c0_i32_0 : i32, i32
  }
  func.func @transform_2(%arg0: i32) -> (i32, i32) {
    %c0_i32 = arith.constant 0 : i32
    %c0_i32_0 = arith.constant 0 : i32
    %c0_i32_1 = arith.constant 0 : i32
    return %c0_i32, %c0_i32_0 : i32, i32
  }
  func.func @transform_3(%arg0: i32) -> (i32, i32) {
    %c0_i32 = arith.constant 0 : i32
    %c0_i32_0 = arith.constant 0 : i32
    %c0_i32_1 = arith.constant 0 : i32
    return %c0_i32, %c0_i32_0 : i32, i32
  }
  func.func @transform_4(%arg0: i32) -> (i32, i32) {
    %c0_i32 = arith.constant 0 : i32
    %c0_i32_0 = arith.constant 0 : i32
    %c0_i32_1 = arith.constant 0 : i32
    return %c0_i32, %c0_i32_0 : i32, i32
  }
  func.func @transform_5(%arg0: i32) -> (i32, i32) {
    %c0_i32 = arith.constant 0 : i32
    %c0_i32_0 = arith.constant 0 : i32
    %c0_i32_1 = arith.constant 0 : i32
    return %c0_i32, %c0_i32_0 : i32, i32
  }
  func.func @transform_6(%arg0: i32) -> (i32, i32) {
    %c0_i32 = arith.constant 0 : i32
    %c0_i32_0 = arith.constant 0 : i32
    return %arg0, %c0_i32 : i32, i32
  }
  func.func @transform_7(%arg0: i32) -> (i32, i32, i32) {
    %c0_i32 = arith.constant 0 : i32
    %c0_i32_0 = arith.constant 0 : i32
    %c0_i32_1 = arith.constant 0 : i32
    return %arg0, %c0_i32, %c0_i32_0 : i32, i32, i32
  }
}

</mosaic_0001>

<llo_original>
// kernel: tpu_custom_call.1
$region0: #{tpu_custom_call.1}
  #allocation0 [shape = 'u32[]', space=smem, size = 0x4, offset = 0x4, fixed_abs, tag = 'smem constant byte address 0x4 - core index']
  #allocation1 [shape = 'u32[144,128]{1,0:T(1,128)}', space=vmem, size = 0x12000, scoped, tag = 'internal scratch']
  %s0 = inlined_call_operand.vmem [shape: f32[16,16], index: 0, kind: input, shape index: {}]
  %s1 = inlined_call_operand.vmem [shape: bf16[16,128], index: 1, kind: input, shape index: {}]
  %s2 = inlined_call_operand.vmem [shape: bf16[128,64], index: 2, kind: input, shape index: {}]
  %s3 = inlined_call_operand.vmem [shape: bf16[64,256], index: 3, kind: input, shape index: {}]
  %s4 = inlined_call_operand.hbm [shape: bf16[256,128], index: 4, kind: input, shape index: {}]
  %s5 = inlined_call_operand.vmem [shape: f32[4,256], index: 5, kind: input, shape index: {}]
  %s6 = inlined_call_operand.hbm [shape: bf16[16,128], index: 6, kind: output, shape index: {0}]
  %s7 = inlined_call_operand.hbm [shape: f32[1,8,128], index: 7, kind: output, shape index: {1}]
  %8 = xla_tuple %s6, %s7
  %s9 = sld [smem:[#allocation0]]
  $region46: #{tpu_custom_call.1} parent=0
    _
  %s11 = ssub.s32 1, %s9
  %s12 = scalar_select 0, %s11, %s9
  $region1: #{tpu_custom_call.1} parent=0
    #allocation2 [shape = 'u8[65536]{0}', space=vmem, size = 0x10000, scoped, tag = 'input window, operand 4, single buffered']
    #allocation3 [shape = 's32[1]{0}', space=sflag, size = 0x4, scoped, tag = 'scoped memory for tpu_custom_call.1']
    #allocation4 [shape = 's32[1]{0}', space=sflag, size = 0x4, scoped, tag = 'scoped memory for tpu_custom_call.1']
    #allocation5 [shape = 'u8[4096]{0}', space=vmem, size = 0x1000, scoped, tag = 'output window, operand 0, single buffered']
    #allocation6 [shape = 'u8[4096]{0}', space=vmem, size = 0x1000, scoped, tag = 'output window, operand 1, single buffered']
    #allocation7 [shape = 's32[1]{0}', space=sflag, size = 0x4, scoped, tag = 'scoped memory for tpu_custom_call.1']
    %13 = vsyncpa [#allocation3], 0
    %14 = vsyncpa [#allocation4], 0
    %15 = vsyncpa [#allocation7], 0
    // Predicated region
    $region2: #{tpu_custom_call.1} parent=1 // pred_check
      _
    $region3: #{tpu_custom_call.1} parent=1 // pred_check_branch
      %17 = sbr.rel (0) target = $region5
    $region4: #{tpu_custom_call.1} parent=1 // pred_region
      _
    $region5: #{tpu_custom_call.1} parent=1 // pred_fallthru
      _
    // Predicated region
    $region6: #{tpu_custom_call.1} parent=1 // pred_check
      _
    $region7: #{tpu_custom_call.1} parent=1 // pred_check_branch
      %19 = sbr.rel (0) target = $region9
    $region8: #{tpu_custom_call.1} parent=1 // pred_region
      _
    $region9: #{tpu_custom_call.1} parent=1 // pred_fallthru
      _
    // Predicated region
    $region10: #{tpu_custom_call.1} parent=1 // pred_check
      _
    $region11: #{tpu_custom_call.1} parent=1 // pred_check_branch
      %21 = sbr.rel (0) target = $region13
    $region12: #{tpu_custom_call.1} parent=1 // pred_region
      _
    $region13: #{tpu_custom_call.1} parent=1 // pred_fallthru
      _
    // Predicated region
    $region14: #{tpu_custom_call.1} parent=1 // pred_check
      _
    $region15: #{tpu_custom_call.1} parent=1 // pred_check_branch
      %23 = sbr.rel (0) target = $region17
    $region16: #{tpu_custom_call.1} parent=1 // pred_region
      _
    $region17: #{tpu_custom_call.1} parent=1 // pred_fallthru
      _
    // Predicated region
    $region18: #{tpu_custom_call.1} parent=1 // pred_check
      _
    $region19: #{tpu_custom_call.1} parent=1 // pred_check_branch
      %25 = sbr.rel (0) target = $region21
    $region20: #{tpu_custom_call.1} parent=1 // pred_region
      %s27 = ssub.s32 2048, 2048
      %28 = vsyncadd [#allocation3], %s27
      %s29 = sshll.u32 [#allocation2], 4
      %s30 = int_to_ptr.vmem [resolvable:$true] %s29
      %35 = dma.hbm_to_vmem [thread:$0]  %s4, 2048, %s30, [#allocation3], 64, 64, 4
    $region21: #{tpu_custom_call.1} parent=1 // pred_fallthru
      _
    // Predicated region
    $region22: #{tpu_custom_call.1} parent=1 // pred_check
      _
    $region23: #{tpu_custom_call.1} parent=1 // pred_check_branch
      %37 = sbr.rel (0) target = $region25
    $region24: #{tpu_custom_call.1} parent=1 // pred_region
      _
    $region25: #{tpu_custom_call.1} parent=1 // pred_fallthru
      _
    // Predicated region
    $region26: #{tpu_custom_call.1} parent=1 // pred_check
      _
    $region27: #{tpu_custom_call.1} parent=1 // pred_check_branch
      %39 = sbr.rel (0) target = $region29
    $region28: #{tpu_custom_call.1} parent=1 // pred_region
      %40 = dma.done [#allocation3], 2048
    $region29: #{tpu_custom_call.1} parent=1 // pred_fallthru
      _
    %v42 = vld [vmem:[%s5] sm:$0x1]
    %v43 = vld [vmem:[%s5 + $0x1] sm:$0x1]
    %s44 = scalar_lea.vmem %s5, 2
    %v45 = vld [vmem:[%s44] ss:$4 sm:$0x3]
    %v46 = vld [vmem:[%s5 + $0x3] sm:$0x1]
    %v47 = vld [vmem:[%s0] sm:$0xff]
    %v48 = vld [vmem:[%s0 + $0x8] sm:$0xff]
    %v49 = vpack.c.bf16 %v48, %v47
    %v50 = vld [vmem:[%s1] sm:$0xf]
    %v51 = vld [vmem:[%s1 + $0x4] sm:$0xf]
    %v52 = vlaneseq
    %v53 = vshrl.u32 %v52, 7
    %v54 = vsub.s32 0, %v53
    %v55 = vrot.slane %v42, %v54
    %v58 = vunpack.c.l.b16 %v50
    %v59 = vunpack.c.l.b16 %v51
    %v60 = vpack.c.b16 %v59, %v58
    %vm62 = vcmask 130048
    %v64 = vsel %vm62, %v49, 0
    %66 = vmatprep.subr.bf16.mxu0 0
    %67 = vmatpush1.bf16.msra.mxu0 %v60
    %68 = vmatprep.subr.bf16.mxu0 0
    %69 = vmatpush1.bf16.msra.mxu0 0
    %70 = vmatprep.subr.bf16.mxu0 0
    %71 = vmatpush1.bf16.msra.mxu0 0
    %72 = vmatprep.subr.bf16.mxu0 0
    %73 = vmatpush1.bf16.msra.mxu0 0
    %74 = vmatprep.subr.bf16.mxu0 0
    %75 = vmatpush1.bf16.msra.mxu0 0
    %76 = vmatprep.subr.bf16.mxu0 0
    %77 = vmatpush1.bf16.msra.mxu0 0
    %78 = vmatprep.subr.bf16.mxu0 0
    %79 = vmatpush1.bf16.msra.mxu0 0
    %80 = vmatprep.subr.bf16.mxu0 0
    %81 = vmatpush1.bf16.msra.mxu0 0
    %82 = vmatprep.subr.bf16.mxu0 0
    %83 = vmatpush1.bf16.msra.mxu0 0
    %84 = vmatprep.subr.bf16.mxu0 0
    %85 = vmatpush1.bf16.msra.mxu0 0
    %86 = vmatprep.subr.bf16.mxu0 0
    %87 = vmatpush1.bf16.msra.mxu0 0
    %88 = vmatprep.subr.bf16.mxu0 0
    %89 = vmatpush1.bf16.msra.mxu0 0
    %90 = vmatprep.subr.bf16.mxu0 0
    %91 = vmatpush1.bf16.msra.mxu0 0
    %92 = vmatprep.subr.bf16.mxu0 0
    %93 = vmatpush1.bf16.msra.mxu0 0
    %94 = vmatprep.subr.bf16.mxu0 0
    %95 = vmatpush1.bf16.msra.mxu0 0
    %96 = vmatprep.subr.bf16.mxu0 0
    %97 = vmatpush1.bf16.msra.mxu0 0
    %98 = vmatprep.mubr.bf16.mxu0 0
    %99 = vmatmul.mubr.bf16.gmra.mrb[0].mxu0 %v64
    %v100 = vpop.f32.mrb[0].mxu0
    %v101 = vadd.f32 %v55, %v100
    %v102 = vpop.f32.mrb[0].mxu0
    %v103 = vpop.f32.mrb[0].mxu0
    %v104 = vadd.f32 %v55, %v103
    %v105 = vpop.f32.mrb[0].mxu0
    %106 = vdwg.mxu0
    %v107 = vmax.f32 %v101, 0.0
    %v108 = vmax.f32 %v104, 0.0
    %v109 = vpack.c.bf16 %v108, %v107
    %v110 = vld [vmem:[%s2] sm:$0xf]
    %v111 = vld [vmem:[%s2 + $0x4] sm:$0xf]
    %v112 = vld [vmem:[%s2 + $0x8] sm:$0xf]
    %v113 = vld [vmem:[%s2 + $0xc] sm:$0xf]
    %v114 = vld [vmem:[%s2 + $0x10] sm:$0xf]
    %v115 = vld [vmem:[%s2 + $0x14] sm:$0xf]
    %v116 = vld [vmem:[%s2 + $0x18] sm:$0xf]
    %v117 = vld [vmem:[%s2 + $0x1c] sm:$0xf]
    %v118 = vld [vmem:[%s2 + $0x20] sm:$0xf]
    %v119 = vld [vmem:[%s2 + $0x24] sm:$0xf]
    %v120 = vld [vmem:[%s2 + $0x28] sm:$0xf]
    %v121 = vld [vmem:[%s2 + $0x2c] sm:$0xf]
    %v122 = vld [vmem:[%s2 + $0x30] sm:$0xf]
    %v123 = vld [vmem:[%s2 + $0x34] sm:$0xf]
    %v124 = vld [vmem:[%s2 + $0x38] sm:$0xf]
    %v125 = vld [vmem:[%s2 + $0x3c] sm:$0xf]
    %v126 = vlaneseq
    %v127 = vshrl.u32 %v126, 7
    %v128 = vsub.s32 0, %v127
    %v129 = vrot.slane %v43, %v128
    %v146 = vunpack.c.l.b16 %v110
    %v147 = vunpack.c.l.b16 %v111
    %v148 = vunpack.c.l.b16 %v112
    %v149 = vunpack.c.l.b16 %v113
    %v150 = vunpack.c.l.b16 %v114
    %v151 = vunpack.c.l.b16 %v115
    %v152 = vunpack.c.l.b16 %v116
    %v153 = vunpack.c.l.b16 %v117
    %v154 = vunpack.c.l.b16 %v118
    %v155 = vunpack.c.l.b16 %v119
    %v156 = vunpack.c.l.b16 %v120
    %v157 = vunpack.c.l.b16 %v121
    %v158 = vunpack.c.l.b16 %v122
    %v159 = vunpack.c.l.b16 %v123
    %v160 = vunpack.c.l.b16 %v124
    %v161 = vunpack.c.l.b16 %v125
    %v162 = vpack.c.b16 %v147, %v146
    %v163 = vpack.c.b16 %v149, %v148
    %v164 = vpack.c.b16 %v151, %v150
    %v165 = vpack.c.b16 %v153, %v152
    %v166 = vpack.c.b16 %v155, %v154
    %v167 = vpack.c.b16 %v157, %v156
    %v168 = vpack.c.b16 %v159, %v158
    %v169 = vpack.c.b16 %v161, %v160
    %178 = vmatprep.subr.bf16.mxu0 0
    %179 = vmatpush1.bf16.msra.mxu0 %v162
    %180 = vmatprep.subr.bf16.mxu0 0
    %181 = vmatpush1.bf16.msra.mxu0 %v163
    %182 = vmatprep.subr.bf16.mxu0 0
    %183 = vmatpush1.bf16.msra.mxu0 %v164
    %184 = vmatprep.subr.bf16.mxu0 0
    %185 = vmatpush1.bf16.msra.mxu0 %v165
    %186 = vmatprep.subr.bf16.mxu0 0
    %187 = vmatpush1.bf16.msra.mxu0 %v166
    %188 = vmatprep.subr.bf16.mxu0 0
    %189 = vmatpush1.bf16.msra.mxu0 %v167
    %190 = vmatprep.subr.bf16.mxu0 0
    %191 = vmatpush1.bf16.msra.mxu0 %v168
    %192 = vmatprep.subr.bf16.mxu0 0
    %193 = vmatpush1.bf16.msra.mxu0 %v169
    %194 = vmatprep.subr.bf16.mxu0 0
    %195 = vmatpush1.bf16.msra.mxu0 0
    %196 = vmatprep.subr.bf16.mxu0 0
    %197 = vmatpush1.bf16.msra.mxu0 0
    %198 = vmatprep.subr.bf16.mxu0 0
    %199 = vmatpush1.bf16.msra.mxu0 0
    %200 = vmatprep.subr.bf16.mxu0 0
    %201 = vmatpush1.bf16.msra.mxu0 0
    %202 = vmatprep.subr.bf16.mxu0 0
    %203 = vmatpush1.bf16.msra.mxu0 0
    %204 = vmatprep.subr.bf16.mxu0 0
    %205 = vmatpush1.bf16.msra.mxu0 0
    %206 = vmatprep.subr.bf16.mxu0 0
    %207 = vmatpush1.bf16.msra.mxu0 0
    %208 = vmatprep.subr.bf16.mxu0 0
    %209 = vmatpush1.bf16.msra.mxu0 0
    %210 = vmatprep.mubr.bf16.mxu0 0
    %211 = vmatmul.mubr.bf16.gmra.mrb[0].mxu0 %v109
    %v212 = vpop.f32.mrb[0].mxu0
    %v213 = vadd.f32 %v129, %v212
    %v214 = vpop.f32.mrb[0].mxu0
    %v215 = vpop.f32.mrb[0].mxu0
    %v216 = vadd.f32 %v129, %v215
    %v217 = vpop.f32.mrb[0].mxu0
    %218 = vdwg.mxu0
    %v219 = vmax.f32 %v213, 0.0
    %v220 = vmax.f32 %v216, 0.0
    %v221 = vpack.c.bf16 %v220, %v219
    %v222 = vld [vmem:[%s3] sm:$0xff]
    %v223 = vld [vmem:[%s3 + $0x8] sm:$0xff]
    %v224 = vld [vmem:[%s3 + $0x10] sm:$0xff]
    %v225 = vld [vmem:[%s3 + $0x18] sm:$0xff]
    %v226 = vld [vmem:[%s3 + $0x20] sm:$0xff]
    %v227 = vld [vmem:[%s3 + $0x28] sm:$0xff]
    %v228 = vld [vmem:[%s3 + $0x30] sm:$0xff]
    %v229 = vld [vmem:[%s3 + $0x38] sm:$0xff]
    %v231 = vlaneseq
    %v232 = vshrl.u32 %v231, 7
    %v233 = vsub.s32 0, %v232
    %v234 = vrot.slane %v45, %v233
    %v235 = vlaneseq
    %v236 = vshrl.u32 %v235, 7
    %v237 = vsub.s32 1, %v236
    %v238 = vrot.slane %v45, %v237
    %v249 = vunpack.c.l.b16 %v222
    %v250 = vunpack.c.h.b16 %v222
    %v251 = vunpack.c.l.b16 %v223
    %v252 = vunpack.c.h.b16 %v223
    %v253 = vunpack.c.l.b16 %v224
    %v254 = vunpack.c.h.b16 %v224
    %v255 = vunpack.c.l.b16 %v225
    %v256 = vunpack.c.h.b16 %v225
    %v257 = vunpack.c.l.b16 %v226
    %v258 = vunpack.c.h.b16 %v226
    %v259 = vunpack.c.l.b16 %v227
    %v260 = vunpack.c.h.b16 %v227
    %v261 = vunpack.c.l.b16 %v228
    %v262 = vunpack.c.h.b16 %v228
    %v263 = vunpack.c.l.b16 %v229
    %v264 = vunpack.c.h.b16 %v229
    %v265 = vpack.c.b16 %v251, %v249
    %v266 = vpack.c.b16 %v252, %v250
    %v267 = vpack.c.b16 %v255, %v253
    %v268 = vpack.c.b16 %v256, %v254
    %v269 = vpack.c.b16 %v259, %v257
    %v270 = vpack.c.b16 %v260, %v258
    %v271 = vpack.c.b16 %v263, %v261
    %v272 = vpack.c.b16 %v264, %v262
    %vm281 = vcmask 523264
    %v283 = vsel %vm281, %v221, 0
    %285 = vmatprep.subr.bf16.mxu0 %v266
    %286 = vmatpush1.bf16.msra.mxu0 %v265
    %287 = vmatprep.subr.bf16.mxu0 %v268
    %288 = vmatpush1.bf16.msra.mxu0 %v267
    %289 = vmatprep.subr.bf16.mxu0 %v270
    %290 = vmatpush1.bf16.msra.mxu0 %v269
    %291 = vmatprep.subr.bf16.mxu0 %v272
    %292 = vmatpush1.bf16.msra.mxu0 %v271
    %293 = vmatprep.subr.bf16.mxu0 0
    %294 = vmatpush1.bf16.msra.mxu0 0
    %295 = vmatprep.subr.bf16.mxu0 0
    %296 = vmatpush1.bf16.msra.mxu0 0
    %297 = vmatprep.subr.bf16.mxu0 0
    %298 = vmatpush1.bf16.msra.mxu0 0
    %299 = vmatprep.subr.bf16.mxu0 0
    %300 = vmatpush1.bf16.msra.mxu0 0
    %301 = vmatprep.subr.bf16.mxu0 0
    %302 = vmatpush1.bf16.msra.mxu0 0
    %303 = vmatprep.subr.bf16.mxu0 0
    %304 = vmatpush1.bf16.msra.mxu0 0
    %305 = vmatprep.subr.bf16.mxu0 0
    %306 = vmatpush1.bf16.msra.mxu0 0
    %307 = vmatprep.subr.bf16.mxu0 0
    %308 = vmatpush1.bf16.msra.mxu0 0
    %309 = vmatprep.subr.bf16.mxu0 0
    %310 = vmatpush1.bf16.msra.mxu0 0
    %311 = vmatprep.subr.bf16.mxu0 0
    %312 = vmatpush1.bf16.msra.mxu0 0
    %313 = vmatprep.subr.bf16.mxu0 0
    %314 = vmatpush1.bf16.msra.mxu0 0
    %315 = vmatprep.subr.bf16.mxu0 0
    %316 = vmatpush1.bf16.msra.mxu0 0
    %317 = vmatprep.mubr.bf16.mxu0 0
    %318 = vmatmul.mubr.bf16.gmra.mrb[0].mxu0 %v283
    %v319 = vpop.f32.mrb[0].mxu0
    %v320 = vadd.f32 %v234, %v319
    %v321 = vpop.f32.mrb[0].mxu0
    %v322 = vadd.f32 %v238, %v321
    %v323 = vpop.f32.mrb[0].mxu0
    %v324 = vadd.f32 %v234, %v323
    %v325 = vpop.f32.mrb[0].mxu0
    %v326 = vadd.f32 %v238, %v325
    %327 = vdwg.mxu0
    %v328 = vmax.f32 %v320, 0.0
    %v329 = vmax.f32 %v322, 0.0
    %v330 = vmax.f32 %v324, 0.0
    %v331 = vmax.f32 %v326, 0.0
    %v332 = vpack.c.bf16 %v330, %v328
    %v333 = vpack.c.bf16 %v331, %v329
    %v334 = vld [vmem:[#allocation2] sm:$0xf]
    %v335 = vld [vmem:[#allocation2 + $0x4] sm:$0xf]
    %v336 = vld [vmem:[#allocation2 + $0x8] sm:$0xf]
    %v337 = vld [vmem:[#allocation2 + $0xc] sm:$0xf]
    %v338 = vld [vmem:[#allocation2 + $0x10] sm:$0xf]
    %v339 = vld [vmem:[#allocation2 + $0x14] sm:$0xf]
    %v340 = vld [vmem:[#allocation2 + $0x18] sm:$0xf]
    %v341 = vld [vmem:[#allocation2 + $0x1c] sm:$0xf]
    %v342 = vld [vmem:[#allocation2 + $0x20] sm:$0xf]
    %v343 = vld [vmem:[#allocation2 + $0x24] sm:$0xf]
    %v344 = vld [vmem:[#allocation2 + $0x28] sm:$0xf]
    %v345 = vld [vmem:[#allocation2 + $0x2c] sm:$0xf]
    %v346 = vld [vmem:[#allocation2 + $0x30] sm:$0xf]
    %v347 = vld [vmem:[#allocation2 + $0x34] sm:$0xf]
    %v348 = vld [vmem:[#allocation2 + $0x38] sm:$0xf]
    %v349 = vld [vmem:[#allocation2 + $0x3c] sm:$0xf]
    %v350 = vld [vmem:[#allocation2 + $0x40] sm:$0xf]
    %v351 = vld [vmem:[#allocation2 + $0x44] sm:$0xf]
    %v352 = vld [vmem:[#allocation2 + $0x48] sm:$0xf]
    %v353 = vld [vmem:[#allocation2 + $0x4c] sm:$0xf]
    %v354 = vld [vmem:[#allocation2 + $0x50] sm:$0xf]
    %v355 = vld [vmem:[#allocation2 + $0x54] sm:$0xf]
    %v356 = vld [vmem:[#allocation2 + $0x58] sm:$0xf]
    %v357 = vld [vmem:[#allocation2 + $0x5c] sm:$0xf]
    %v358 = vld [vmem:[#allocation2 + $0x60] sm:$0xf]
    %v359 = vld [vmem:[#allocation2 + $0x64] sm:$0xf]
    %v360 = vld [vmem:[#allocation2 + $0x68] sm:$0xf]
    %v361 = vld [vmem:[#allocation2 + $0x6c] sm:$0xf]
    %v362 = vld [vmem:[#allocation2 + $0x70] sm:$0xf]
    %v363 = vld [vmem:[#allocation2 + $0x74] sm:$0xf]
    %v364 = vld [vmem:[#allocation2 + $0x78] sm:$0xf]
    %v365 = vld [vmem:[#allocation2 + $0x7c] sm:$0xf]
    %v366 = vlaneseq
    %v367 = vshrl.u32 %v366, 7
    %v368 = vsub.s32 0, %v367
    %v369 = vrot.slane %v46, %v368
    %v402 = vunpack.c.l.b16 %v334
    %v403 = vunpack.c.l.b16 %v335
    %v404 = vunpack.c.l.b16 %v336
    %v405 = vunpack.c.l.b16 %v337
    %v406 = vunpack.c.l.b16 %v338
    %v407 = vunpack.c.l.b16 %v339
    %v408 = vunpack.c.l.b16 %v340
    %v409 = vunpack.c.l.b16 %v341
    %v410 = vunpack.c.l.b16 %v342
    %v411 = vunpack.c.l.b16 %v343
    %v412 = vunpack.c.l.b16 %v344
    %v413 = vunpack.c.l.b16 %v345
    %v414 = vunpack.c.l.b16 %v346
    %v415 = vunpack.c.l.b16 %v347
    %v416 = vunpack.c.l.b16 %v348
    %v417 = vunpack.c.l.b16 %v349
    %v418 = vunpack.c.l.b16 %v350
    %v419 = vunpack.c.l.b16 %v351
    %v420 = vunpack.c.l.b16 %v352
    %v421 = vunpack.c.l.b16 %v353
    %v422 = vunpack.c.l.b16 %v354
    %v423 = vunpack.c.l.b16 %v355
    %v424 = vunpack.c.l.b16 %v356
    %v425 = vunpack.c.l.b16 %v357
    %v426 = vunpack.c.l.b16 %v358
    %v427 = vunpack.c.l.b16 %v359
    %v428 = vunpack.c.l.b16 %v360
    %v429 = vunpack.c.l.b16 %v361
    %v430 = vunpack.c.l.b16 %v362
    %v431 = vunpack.c.l.b16 %v363
    %v432 = vunpack.c.l.b16 %v364
    %v433 = vunpack.c.l.b16 %v365
    %v434 = vpack.c.b16 %v403, %v402
    %v435 = vpack.c.b16 %v405, %v404
    %v436 = vpack.c.b16 %v407, %v406
    %v437 = vpack.c.b16 %v409, %v408
    %v438 = vpack.c.b16 %v411, %v410
    %v439 = vpack.c.b16 %v413, %v412
    %v440 = vpack.c.b16 %v415, %v414
    %v441 = vpack.c.b16 %v417, %v416
    %v442 = vpack.c.b16 %v419, %v418
    %v443 = vpack.c.b16 %v421, %v420
    %v444 = vpack.c.b16 %v423, %v422
    %v445 = vpack.c.b16 %v425, %v424
    %v446 = vpack.c.b16 %v427, %v426
    %v447 = vpack.c.b16 %v429, %v428
    %v448 = vpack.c.b16 %v431, %v430
    %v449 = vpack.c.b16 %v433, %v432
    %466 = vmatprep.subr.bf16.mxu0 0
    %467 = vmatpush1.bf16.msra.mxu0 %v434
    %468 = vmatprep.subr.bf16.mxu0 0
    %469 = vmatpush1.bf16.msra.mxu0 %v435
    %470 = vmatprep.subr.bf16.mxu0 0
    %471 = vmatpush1.bf16.msra.mxu0 %v436
    %472 = vmatprep.subr.bf16.mxu0 0
    %473 = vmatpush1.bf16.msra.mxu0 %v437
    %474 = vmatprep.subr.bf16.mxu0 0
    %475 = vmatpush1.bf16.msra.mxu0 %v438
    %476 = vmatprep.subr.bf16.mxu0 0
    %477 = vmatpush1.bf16.msra.mxu0 %v439
    %478 = vmatprep.subr.bf16.mxu0 0
    %479 = vmatpush1.bf16.msra.mxu0 %v440
    %480 = vmatprep.subr.bf16.mxu0 0
    %481 = vmatpush1.bf16.msra.mxu0 %v441
    %482 = vmatprep.subr.bf16.mxu0 0
    %483 = vmatpush1.bf16.msra.mxu0 %v442
    %484 = vmatprep.subr.bf16.mxu0 0
    %485 = vmatpush1.bf16.msra.mxu0 %v443
    %486 = vmatprep.subr.bf16.mxu0 0
    %487 = vmatpush1.bf16.msra.mxu0 %v444
    %488 = vmatprep.subr.bf16.mxu0 0
    %489 = vmatpush1.bf16.msra.mxu0 %v445
    %490 = vmatprep.subr.bf16.mxu0 0
    %491 = vmatpush1.bf16.msra.mxu0 %v446
    %492 = vmatprep.subr.bf16.mxu0 0
    %493 = vmatpush1.bf16.msra.mxu0 %v447
    %494 = vmatprep.subr.bf16.mxu0 0
    %495 = vmatpush1.bf16.msra.mxu0 %v448
    %496 = vmatprep.subr.bf16.mxu0 0
    %497 = vmatpush1.bf16.msra.mxu0 %v449
    %498 = vmatprep.mubr.bf16.mxu0 %v333
    %499 = vmatmul.mubr.bf16.gmra.mrb[0].mxu0 %v332
    %v500 = vpop.f32.mrb[0].mxu0
    %v501 = vadd.f32 %v369, %v500
    %v502 = vpop.f32.mrb[0].mxu0
    %v503 = vpop.f32.mrb[0].mxu0
    %v504 = vadd.f32 %v369, %v503
    %v505 = vpop.f32.mrb[0].mxu0
    %506 = vdwg.mxu0
    %v507 = vlaneseq
    %v508 = vshrl.u32 %v507, 7
    %v509 = vadd.s32 %v508, 8
    %s510 = smul.u32 0, 16
    %v511 = vstv %s510
    %v512 = vadd.s32 %v508, %v511
    %v513 = vadd.s32 %v509, %v511
    %v514 = vlaneseq
    %v515 = vand.u32 %v514, 127
    %vm516 = vcmp.eq.s32.totalorder %v515, 7
    %vm517 = vcmp.lt.s32.totalorder %v512, 2
    %vm518 = vcmp.lt.s32.totalorder %v513, 2
    %vm519 = vmand %vm516, %vm517
    %vm520 = vmand %vm516, %vm518
    %v521 = vsel %vm519, %v501, 0.0
    %v522 = vsel %vm520, %v504, 0.0
    %v523 = vadd.f32 %v521, %v522
    %524 = vadd.xlane.f32.xlu0 %v523
    %v525 = vpop.xlane.xlu0 %524
    %v526 = vrot.slane %v525, 4
    %v527 = vadd.f32 %v525, %v526
    %v528 = vrot.slane %v527, 2
    %v529 = vadd.f32 %v527, %v528
    %v530 = vrot.slane %v529, 1
    %v531 = vadd.f32 %v529, %v530
    %s532 = vtos %v531
    %vm533 = vcmp.eq.s32.totalorder %v508, 0
    %vm534 = vcmp.eq.s32.totalorder %v515, 0
    %vm535 = vmand %vm533, %vm534
    %v536 = vstv %s532
    %v537 = vsel %vm535, %v536, 0.0
    %538 = vst [vmem:[#allocation6] sm:$0xff] %v537
    %v539 = vpack.c.bf16 %v504, %v501
    %v541 = vunpack.c.l.b16 %v539
    %v542 = vunpack.c.h.b16 %v539
    %v543 = vpack.c.b16 %v541, %v541
    %v544 = vpack.c.b16 %v542, %v542
    %547 = vst [vmem:[#allocation5] sm:$0xf] %v543
    %548 = vst [vmem:[#allocation5 + $0x4] sm:$0xf] %v544
    // Predicated region
    $region30: #{tpu_custom_call.1} parent=1 // pred_check
      _
    $region31: #{tpu_custom_call.1} parent=1 // pred_check_branch
      %550 = sbr.rel (0) target = $region33
    $region32: #{tpu_custom_call.1} parent=1 // pred_region
      %s552 = ssub.s32 128, 128
      %553 = vsyncadd [#allocation4], %s552
      %s554 = sshll.u32 [#allocation5], 4
      %s555 = int_to_ptr.vmem [resolvable:$true] %s554
      %560 = dma.vmem_to_hbm [thread:$0]  %s555, 128, %s6, [#allocation4], 64, 64, 4
    $region33: #{tpu_custom_call.1} parent=1 // pred_fallthru
      _
    // Predicated region
    $region34: #{tpu_custom_call.1} parent=1 // pred_check
      _
    $region35: #{tpu_custom_call.1} parent=1 // pred_check_branch
      %562 = sbr.rel (0) target = $region37
    $region36: #{tpu_custom_call.1} parent=1 // pred_region
      %s564 = ssub.s32 128, 128
      %565 = vsyncadd [#allocation7], %s564
      %s567 = sshll.u32 [#allocation6], 4
      %s568 = int_to_ptr.vmem [resolvable:$true] %s567
      %570 = dma.vmem_to_hbm [thread:$0]  %s568, 128, %s7, [#allocation7]
    $region37: #{tpu_custom_call.1} parent=1 // pred_fallthru
      _
    // Predicated region
    $region38: #{tpu_custom_call.1} parent=1 // pred_check
      _
    $region39: #{tpu_custom_call.1} parent=1 // pred_check_branch
      %572 = sbr.rel (0) target = $region41
    $region40: #{tpu_custom_call.1} parent=1 // pred_region
      %573 = dma.done [#allocation4], 128
    $region41: #{tpu_custom_call.1} parent=1 // pred_fallthru
      _
    // Predicated region
    $region42: #{tpu_custom_call.1} parent=1 // pred_check
      _
    $region43: #{tpu_custom_call.1} parent=1 // pred_check_branch
      %575 = sbr.rel (0) target = $region45
    $region44: #{tpu_custom_call.1} parent=1 // pred_region
      %576 = dma.done [#allocation7], 128
    $region45: #{tpu_custom_call.1} parent=1 // pred_fallthru
      _
    %577 = vsyncpa [#allocation3], 1
    %578 = vsyncpa [#allocation4], 1
    %579 = vsyncpa [#allocation7], 1

</llo_original>
